<compile_context>
chip_gen: v5e
topology: v5e:2x2
jax: 0.10.0
libtpu: 0.0.40
codegen_flags: <defaults>
</compile_context>

<pallas_src>
import functools

import jax
import jax.numpy as jnp
from jax.experimental import pallas as pl
from jax.experimental.pallas import tpu as pltpu

EPS = 1e-07
LANES = 128
SUBLANES = 8
MAX_BLOCK_ROWS = 8192                   # (8192, 128) f32 block = 4 MiB / input
VMEM_LIMIT_BYTES = 32 * 1024 * 1024     # 2 inputs x 2 buffers x 4 MiB + slack


def _packing(dtype):
    """Sublane packing factor: 1 for 32-bit, 2 for 16-bit, 4 for 8-bit dtypes."""
    return max(1, 4 // dtype.itemsize)


def _dice_partial_kernel(p_ref, t_ref, out_ref, acc_ref, *,
                         block_rows, steps_per_split, total_rows,
                         chains, any_partial):
    s = pl.program_id(0)   # split index ("parallel"; sharded across TCs on v7x)
    i = pl.program_id(1)   # step within split ("arbitrary" reduction axis)

    @pl.when(i == 0)
    def _init():
        acc_ref[...] = jnp.zeros_like(acc_ref)

    # Cast in-kernel so narrow-dtype inputs are read at native HBM byte count.
    p = p_ref[...].astype(jnp.float32)
    t = t_ref[...].astype(jnp.float32)

    groups = block_rows // (SUBLANES * chains)

    def _accumulate(pv, tv):
        # `chains` independent partial accumulators -> independent vadd chains
        # (ILP across the 4 VALU slots); combined only in the finalize step.
        pt = (pv * tv).reshape(groups, chains, SUBLANES, LANES)
        pu = (pv + tv).reshape(groups, chains, SUBLANES, LANES)
        acc_ref[0] += jnp.sum(pt, axis=0)
        acc_ref[1] += jnp.sum(pu, axis=0)

    if any_partial:
        # Only the (single) ragged last block and overhanging megacore steps
        # pay for the mask; every full block takes the cheap branch at runtime.
        row0 = (s * steps_per_split + i) * block_rows
        is_partial = row0 + block_rows > total_rows

        @pl.when(jnp.logical_not(is_partial))
        def _full():
            _accumulate(p, t)

        @pl.when(is_partial)
        def _tail():
            local_row = jax.lax.broadcasted_iota(jnp.int32, (block_rows, LANES), 0)
            valid = (row0 + local_row) < total_rows
            _accumulate(jnp.where(valid, p, 0.0), jnp.where(valid, t, 0.0))
    else:
        _accumulate(p, t)

    @pl.when(i == pl.num_programs(1) - 1)
    def _finalize():
        out_ref[0, 0] = jnp.sum(acc_ref[0])   # partial intersection: sum(p * t)
        out_ref[0, 1] = jnp.sum(acc_ref[1])   # partial union: sum(p) + sum(t)


def dice_loss(predicted, target, *, max_block_rows=MAX_BLOCK_ROWS):
    """1 - dice_coefficient(predicted, target), computed with a Pallas kernel."""
    assert predicted.shape == target.shape
    p_flat = predicted.reshape(-1)
    t_flat = target.reshape(-1)
    n = p_flat.shape[0]

    # Dtype-aware sublane alignment: bf16 packs 16 rows/tile, int8/fp8 pack 32.
    row_align = SUBLANES * max(_packing(p_flat.dtype), _packing(t_flat.dtype))

    # Lane-dense (rows, 128) view.  If n % 128 == 0 the reshape is free; the
    # (rare) unaligned case pads with zeros, which are sum-neutral.
    rows = -(-n // LANES)
    rows = max(rows, row_align)
    n_pad = rows * LANES
    if n_pad != n:
        # TODO(synk): when n % 128 != 0 this still materializes one padded HBM
        # copy per input; a fully copy-free ragged tail would need manual DMA
        # via memory_space=pl.ANY, which isn't worth the complexity here.
        p_flat = jnp.pad(p_flat, (0, n_pad - n))
        t_flat = jnp.pad(t_flat, (0, n_pad - n))
    p2 = p_flat.reshape(rows, LANES)
    t2 = t_flat.reshape(rows, LANES)

    # Block size: as large as possible (pure HBM streaming); multiple of 64
    # rows so 8 accumulator chains and all sublane packings are satisfied.
    if rows >= 64:
        block_rows = min(max_block_rows, (rows // 64) * 64)
    else:
        block_rows = (rows // row_align) * row_align
    chains = 8
    while block_rows % (SUBLANES * chains) != 0:
        chains //= 2

    nb = -(-rows // block_rows)                 # number of row-blocks
    num_splits = 2 if nb >= 2 else 1            # megacore split (v7x 2 TCs)
    steps_per_split = -(-nb // num_splits)      # robust for odd nb
    has_overhang = num_splits * steps_per_split > nb
    any_partial = has_overhang or (rows % block_rows != 0)

    def block_index_map(s, i):
        # Clamp so the overhanging step of the megacore split stays in range;
        # the in-kernel mask zeroes its (duplicate) contribution.
        return (jnp.minimum(s * steps_per_split + i, nb - 1), 0)

    kernel = functools.partial(
        _dice_partial_kernel,
        block_rows=block_rows,
        steps_per_split=steps_per_split,
        total_rows=rows,
        chains=chains,
        any_partial=any_partial,
    )

    partials = pl.pallas_call(
        kernel,
        out_shape=jax.ShapeDtypeStruct((num_splits, 2), jnp.float32),
        grid_spec=pltpu.PrefetchScalarGridSpec(
            num_scalar_prefetch=0,
            grid=(num_splits, steps_per_split),
            in_specs=[
                pl.BlockSpec((block_rows, LANES), block_index_map),
                pl.BlockSpec((block_rows, LANES), block_index_map),
            ],
            out_specs=pl.BlockSpec((1, 2), lambda s, i: (s, 0),
                                   memory_space=pltpu.SMEM),
            scratch_shapes=[
                pltpu.VMEM((2, chains, SUBLANES, LANES), jnp.float32),
            ],
        ),
        compiler_params=pltpu.CompilerParams(
            dimension_semantics=("parallel", "arbitrary"),
            vmem_limit_bytes=VMEM_LIMIT_BYTES,
        ),
    )(p2, t2)

    # Negligible scalar work: combine the per-split partial sums.
    intersection = jnp.sum(partials[:, 0])
    union = jnp.sum(partials[:, 1])
    dice = (2.0 * intersection + EPS) / (union + EPS)
    return 1.0 - dice


if __name__ == "__main__":
    key = jax.random.PRNGKey(0)
    kp, kt = jax.random.split(key)

    def ref_loss(p, t):
        p = p.astype(jnp.float32)
        t = t.astype(jnp.float32)
        inter = jnp.sum(p * t)
        union = jnp.sum(p) + jnp.sum(t)
        return 1.0 - (2.0 * inter + EPS) / (union + EPS)

    # Small NCHW segmentation-style inputs (single full block, no mask path).
    predicted = jax.nn.sigmoid(jax.random.normal(kp, (2, 4, 16, 16), jnp.float32))
    target = (jax.random.uniform(kt, (2, 4, 16, 16)) > 0.5).astype(jnp.float32)
    loss = dice_loss(predicted, target)
    jax.block_until_ready(loss)
    assert jnp.allclose(loss, ref_loss(predicted, target), atol=1e-5, rtol=1e-5), loss

    # Multi-block path: 2-way split + ragged tail (masked partial last block).
    kp2, kt2 = jax.random.split(jax.random.PRNGKey(1))
    pred2 = jax.nn.sigmoid(jax.random.normal(kp2, (2, 4, 300, 150), jnp.float32))
    targ2 = (jax.random.uniform(kt2, (2, 4, 300, 150)) > 0.5).astype(jnp.float32)
    loss2 = dice_loss(pred2, targ2)
    jax.block_until_ready(loss2)
    assert jnp.allclose(loss2, ref_loss(pred2, targ2), atol=1e-4, rtol=1e-4), loss2

    # Odd block count: exercises the clamped / overhanging megacore step.
    loss3 = dice_loss(pred2, targ2, max_block_rows=1024)
    jax.block_until_ready(loss3)
    assert jnp.allclose(loss3, ref_loss(pred2, targ2), atol=1e-4, rtol=1e-4), loss3

    # Narrow-dtype target (bf16): f32 cast happens in-kernel, halving one stream.
    loss4 = dice_loss(predicted, target.astype(jnp.bfloat16))
    jax.block_until_ready(loss4)
    assert jnp.allclose(loss4, ref_loss(predicted, target), atol=1e-5, rtol=1e-5), loss4

    print("KERNEL_OK")
</pallas_src>

<mosaic_0001>
module attributes {stable_mosaic.version = 11 : i64} {
  func.func @_dice_partial_kernel(%arg0: i32, %arg1: i32, %arg2: memref<16x128xf32, #tpu.memory_space<vmem>>, %arg3: memref<16x128xf32, #tpu.memory_space<vmem>>, %arg4: memref<1x2xf32, #tpu.memory_space<smem>>, %arg5: memref<2x2x8x128xf32, #tpu.memory_space<vmem>>) attributes {dimension_semantics = [#tpu.dimension_semantics<parallel>, #tpu.dimension_semantics<arbitrary>], iteration_bounds = array<i64: 1, 1>, scalar_prefetch = 0 : i64, scratch_operands = 1 : i64, tpu.core_type = #tpu.core_type<tc>, window_params = [{transform_indices = @transform_0, window_bounds = array<i64: 16, 128>}, {transform_indices = @transform_1, window_bounds = array<i64: 16, 128>}, {transform_indices = @transform_2, window_bounds = array<i64: 1, 2>}]} {
    %c0_i32 = arith.constant 0 : i32
    %0 = arith.cmpi eq, %arg1, %c0_i32 : i32
    %1 = arith.extui %0 : i1 to i32
    %c0_i32_0 = arith.constant 0 : i32
    %2 = arith.cmpi ne, %1, %c0_i32_0 : i32
    scf.if %2 {
      %cst_22 = arith.constant 0.000000e+00 : f32
      %26 = vector.broadcast %cst_22 : f32 to vector<2x2x8x128xf32>
      %c0_23 = arith.constant 0 : index
      %c0_24 = arith.constant 0 : index
      %c0_25 = arith.constant 0 : index
      %c0_26 = arith.constant 0 : index
      %27 = vector.load %arg5[%c0_23, %c0_24, %c0_25, %c0_26] : memref<2x2x8x128xf32, #tpu.memory_space<vmem>>, vector<2x2x8x128xf32>
      tpu.vector_store %arg5[%c0_23, %c0_24, %c0_25, %c0_26], %26 {strides = array<i32>} : memref<2x2x8x128xf32, #tpu.memory_space<vmem>>, vector<2x2x8x128xf32>,
    } else {
    }
    %c0 = arith.constant 0 : index
    %c0_1 = arith.constant 0 : index
    %3 = vector.load %arg2[%c0, %c0_1] : memref<16x128xf32, #tpu.memory_space<vmem>>, vector<16x128xf32>
    %c0_2 = arith.constant 0 : index
    %c0_3 = arith.constant 0 : index
    %4 = vector.load %arg3[%c0_2, %c0_3] : memref<16x128xf32, #tpu.memory_space<vmem>>, vector<16x128xf32>
    %5 = arith.mulf %3, %4 : vector<16x128xf32>
    %6 = vector.shape_cast %5 : vector<16x128xf32> to vector<1x2x8x128xf32>
    %7 = arith.addf %3, %4 : vector<16x128xf32>
    %8 = vector.shape_cast %7 : vector<16x128xf32> to vector<1x2x8x128xf32>
    %c0_4 = arith.constant 0 : index
    %c0_5 = arith.constant 0 : index
    %c0_6 = arith.constant 0 : index
    %c0_7 = arith.constant 0 : index
    %9 = vector.load %arg5[%c0_4, %c0_5, %c0_6, %c0_7] : memref<2x2x8x128xf32, #tpu.memory_space<vmem>>, vector<1x2x8x128xf32>
    %10 = vector.shape_cast %9 : vector<1x2x8x128xf32> to vector<2x8x128xf32>
    %cst = arith.constant dense<0.000000e+00> : vector<2x8x128xf32>
    %11 = vector.multi_reduction <add>, %6, %cst [0] : vector<1x2x8x128xf32> to vector<2x8x128xf32>
    %12 = arith.addf %10, %11 : vector<2x8x128xf32>
    %c0_8 = arith.constant 0 : index
    %c0_9 = arith.constant 0 : index
    %c0_10 = arith.constant 0 : index
    %c0_11 = arith.constant 0 : index
    %13 = vector.load %arg5[%c0_8, %c0_9, %c0_10, %c0_11] : memref<2x2x8x128xf32, #tpu.memory_space<vmem>>, vector<1x2x8x128xf32>
    %14 = vector.shape_cast %13 : vector<1x2x8x128xf32> to vector<2x8x128xf32>
    %15 = vector.shape_cast %12 : vector<2x8x128xf32> to vector<1x2x8x128xf32>
    tpu.vector_store %arg5[%c0_8, %c0_9, %c0_10, %c0_11], %15 {strides = array<i32>} : memref<2x2x8x128xf32, #tpu.memory_space<vmem>>, vector<1x2x8x128xf32>,
    %c1 = arith.constant 1 : index
    %c0_12 = arith.constant 0 : index
    %c0_13 = arith.constant 0 : index
    %c0_14 = arith.constant 0 : index
    %16 = vector.load %arg5[%c1, %c0_12, %c0_13, %c0_14] : memref<2x2x8x128xf32, #tpu.memory_space<vmem>>, vector<1x2x8x128xf32>
    %17 = vector.shape_cast %16 : vector<1x2x8x128xf32> to vector<2x8x128xf32>
    %cst_15 = arith.constant dense<0.000000e+00> : vector<2x8x128xf32>
    %18 = vector.multi_reduction <add>, %8, %cst_15 [0] : vector<1x2x8x128xf32> to vector<2x8x128xf32>
    %19 = arith.addf %17, %18 : vector<2x8x128xf32>
    %c1_16 = arith.constant 1 : index
    %c0_17 = arith.constant 0 : index
    %c0_18 = arith.constant 0 : index
    %c0_19 = arith.constant 0 : index
    %20 = vector.load %arg5[%c1_16, %c0_17, %c0_18, %c0_19] : memref<2x2x8x128xf32, #tpu.memory_space<vmem>>, vector<1x2x8x128xf32>
    %21 = vector.shape_cast %20 : vector<1x2x8x128xf32> to vector<2x8x128xf32>
    %22 = vector.shape_cast %19 : vector<2x8x128xf32> to vector<1x2x8x128xf32>
    tpu.vector_store %arg5[%c1_16, %c0_17, %c0_18, %c0_19], %22 {strides = array<i32>} : memref<2x2x8x128xf32, #tpu.memory_space<vmem>>, vector<1x2x8x128xf32>,
    %c0_i32_20 = arith.constant 0 : i32
    %23 = arith.cmpi eq, %arg1, %c0_i32_20 : i32
    %24 = arith.extui %23 : i1 to i32
    %c0_i32_21 = arith.constant 0 : i32
    %25 = arith.cmpi ne, %24, %c0_i32_21 : i32
    scf.if %25 {
      %c0_22 = arith.constant 0 : index
      %c0_23 = arith.constant 0 : index
      %c0_24 = arith.constant 0 : index
      %c0_25 = arith.constant 0 : index
      %26 = vector.load %arg5[%c0_22, %c0_23, %c0_24, %c0_25] : memref<2x2x8x128xf32, #tpu.memory_space<vmem>>, vector<1x2x8x128xf32>
      %27 = vector.shape_cast %26 : vector<1x2x8x128xf32> to vector<2x8x128xf32>
      %28 = vector.shape_cast %27 : vector<2x8x128xf32> to vector<1x2x8x128xf32>
      %cst_26 = arith.constant dense<0.000000e+00> : vector<1xf32>
      %29 = vector.multi_reduction <add>, %28, %cst_26 [1, 2, 3] : vector<1x2x8x128xf32> to vector<1xf32>
      %30 = vector.shape_cast %29 : vector<1xf32> to vector<1x1x1x1xf32>
      %31 = vector.extract %30[0, 0, 0, 0] : f32 from vector<1x1x1x1xf32>
      %c0_27 = arith.constant 0 : index
      %c0_28 = arith.constant 0 : index
      %32 = memref.load %arg4[%c0_27, %c0_28] : memref<1x2xf32, #tpu.memory_space<smem>>
      memref.store %31, %arg4[%c0_27, %c0_28] : memref<1x2xf32, #tpu.memory_space<smem>>
      %c1_29 = arith.constant 1 : index
      %c0_30 = arith.constant 0 : index
      %c0_31 = arith.constant 0 : index
      %c0_32 = arith.constant 0 : index
      %33 = vector.load %arg5[%c1_29, %c0_30, %c0_31, %c0_32] : memref<2x2x8x128xf32, #tpu.memory_space<vmem>>, vector<1x2x8x128xf32>
      %34 = vector.shape_cast %33 : vector<1x2x8x128xf32> to vector<2x8x128xf32>
      %35 = vector.shape_cast %34 : vector<2x8x128xf32> to vector<1x2x8x128xf32>
      %cst_33 = arith.constant dense<0.000000e+00> : vector<1xf32>
      %36 = vector.multi_reduction <add>, %35, %cst_33 [1, 2, 3] : vector<1x2x8x128xf32> to vector<1xf32>
      %37 = vector.shape_cast %36 : vector<1xf32> to vector<1x1x1x1xf32>
      %38 = vector.extract %37[0, 0, 0, 0] : f32 from vector<1x1x1x1xf32>
      %c0_34 = arith.constant 0 : index
      %c1_35 = arith.constant 1 : index
      %39 = memref.load %arg4[%c0_34, %c1_35] : memref<1x2xf32, #tpu.memory_space<smem>>
      memref.store %38, %arg4[%c0_34, %c1_35] : memref<1x2xf32, #tpu.memory_space<smem>>
    } else {
    }
    return
  }
  func.func @transform_0(%arg0: i32, %arg1: i32) -> (i32, i32) {
    %c1_i32 = arith.constant 1 : i32
    %0 = arith.muli %arg0, %c1_i32 : i32
    %1 = arith.addi %0, %arg1 : i32
    %c0_i32 = arith.constant 0 : i32
    %2 = arith.minsi %1, %c0_i32 : i32
    %c0_i32_0 = arith.constant 0 : i32
    %c0_i32_1 = arith.constant 0 : i32
    return %2, %c0_i32_0 : i32, i32
  }
  func.func @transform_1(%arg0: i32, %arg1: i32) -> (i32, i32) {
    %c1_i32 = arith.constant 1 : i32
    %0 = arith.muli %arg0, %c1_i32 : i32
    %1 = arith.addi %0, %arg1 : i32
    %c0_i32 = arith.constant 0 : i32
    %2 = arith.minsi %1, %c0_i32 : i32
    %c0_i32_0 = arith.constant 0 : i32
    %c0_i32_1 = arith.constant 0 : i32
    return %2, %c0_i32_0 : i32, i32
  }
  func.func @transform_2(%arg0: i32, %arg1: i32) -> (i32, i32) {
    %c0_i32 = arith.constant 0 : i32
    %c0_i32_0 = arith.constant 0 : i32
    return %arg0, %c0_i32 : i32, i32
  }
}

</mosaic_0001>

<llo_original>
// kernel: tpu_custom_call.1
$region0: #{tpu_custom_call.1}
  #allocation0 [shape = 'u32[]', space=smem, size = 0x4, offset = 0x4, fixed_abs, tag = 'smem constant byte address 0x4 - core index']
  #allocation1 [shape = 'u32[72,128]{1,0:T(1,128)}', space=vmem, size = 0x9000, scoped, tag = 'internal scratch']
  #allocation2 [shape = 'f32[2,2,8,128]{3,2,1,0:T(8,128)}', space=vmem, size = 0x4000, scoped, tag = 'scratch operand']
  %s0 = inlined_call_operand.hbm [shape: f32[16,128], index: 0, kind: input, shape index: {}]
  %s1 = inlined_call_operand.hbm [shape: f32[16,128], index: 1, kind: input, shape index: {}]
  %s2 = inlined_call_operand.hbm [shape: f32[1,2], index: 2, kind: output, shape index: {}]
  %s3 = sld [smem:[#allocation0]]
  $region34: #{tpu_custom_call.1} parent=0
    _
  %s5 = ssub.s32 1, %s3
  %s6 = scalar_select 0, %s5, %s3
  $region1: #{tpu_custom_call.1} parent=0
    #allocation3 [shape = 'u8[8192]{0}', space=vmem, size = 0x2000, scoped, tag = 'input window, operand 0, single buffered']
    #allocation4 [shape = 's32[1]{0}', space=sflag, size = 0x4, scoped, tag = 'scoped memory for tpu_custom_call.1']
    #allocation5 [shape = 's32[1]{0}', space=sflag, size = 0x4, scoped, tag = 'scoped memory for tpu_custom_call.1']
    #allocation6 [shape = 'u8[8192]{0}', space=vmem, size = 0x2000, scoped, tag = 'input window, operand 1, single buffered']
    #allocation7 [shape = 's32[1]{0}', space=sflag, size = 0x4, scoped, tag = 'scoped memory for tpu_custom_call.1']
    #allocation8 [shape = 'u8[512]{0}', space=smem, size = 0x200, scoped, tag = 'output window, operand 0, single buffered']
    %7 = vsyncpa [#allocation4], 0
    %8 = vsyncpa [#allocation7], 0
    %9 = vsyncpa [#allocation5], 0
    // Predicated region
    $region2: #{tpu_custom_call.1} parent=1 // pred_check
      _
    $region3: #{tpu_custom_call.1} parent=1 // pred_check_branch
      %11 = sbr.rel (0) target = $region5
    $region4: #{tpu_custom_call.1} parent=1 // pred_region
      %s12 = sadd.s32 0, 0
      %p13 = scmp.lt.s32.totalorder %s12, 0
      %s14 = scalar_select %p13, %s12, 0
      %s15 = smul.u32 2, %s14
      %17 = vsyncadd [#allocation4], 0
      %s18 = smul.addr %s15, 8
      %s19 = scalar_lea.hbm %s0, %s18
      %s20 = sshll.u32 %s19, 4
      %s21 = int_to_ptr.hbm [resolvable:$true] %s20
      %s22 = sshll.u32 [#allocation3], 4
      %s23 = int_to_ptr.vmem [resolvable:$true] %s22
      %28 = dma.hbm_to_vmem [thread:$0]  %s21, 256, %s23, [#allocation4], 128, 128, 8
    $region5: #{tpu_custom_call.1} parent=1 // pred_fallthru
      _
    // Predicated region
    $region6: #{tpu_custom_call.1} parent=1 // pred_check
      _
    $region7: #{tpu_custom_call.1} parent=1 // pred_check_branch
      %30 = sbr.rel (0) target = $region9
    $region8: #{tpu_custom_call.1} parent=1 // pred_region
      %s31 = sadd.s32 0, 0
      %p32 = scmp.lt.s32.totalorder %s31, 0
      %s33 = scalar_select %p32, %s31, 0
      %s34 = smul.u32 2, %s33
      %36 = vsyncadd [#allocation7], 0
      %s37 = smul.addr %s34, 8
      %s38 = scalar_lea.hbm %s1, %s37
      %s39 = sshll.u32 %s38, 4
      %s40 = int_to_ptr.hbm [resolvable:$true] %s39
      %s41 = sshll.u32 [#allocation6], 4
      %s42 = int_to_ptr.vmem [resolvable:$true] %s41
      %47 = dma.hbm_to_vmem [thread:$0]  %s40, 256, %s42, [#allocation7], 128, 128, 8
    $region9: #{tpu_custom_call.1} parent=1 // pred_fallthru
      _
    // Predicated region
    $region10: #{tpu_custom_call.1} parent=1 // pred_check
      _
    $region11: #{tpu_custom_call.1} parent=1 // pred_check_branch
      %49 = sbr.rel (0) target = $region13
    $region12: #{tpu_custom_call.1} parent=1 // pred_region
      %51 = dma.done [#allocation4], 256
    $region13: #{tpu_custom_call.1} parent=1 // pred_fallthru
      _
    // Predicated region
    $region14: #{tpu_custom_call.1} parent=1 // pred_check
      _
    $region15: #{tpu_custom_call.1} parent=1 // pred_check_branch
      %53 = sbr.rel (0) target = $region17
    $region16: #{tpu_custom_call.1} parent=1 // pred_region
      %55 = dma.done [#allocation7], 256
    $region17: #{tpu_custom_call.1} parent=1 // pred_fallthru
      _
    %s56 = sadd.s32 0, 0
    %p57 = scmp.lt.s32.totalorder %s56, 0
    %s58 = scalar_select %p57, %s56, 0
    %s59 = smul.u32 2, %s58
    %s60 = sadd.s32 0, 0
    %p61 = scmp.lt.s32.totalorder %s60, 0
    %s62 = scalar_select %p61, %s60, 0
    %s63 = smul.u32 2, %s62
    %p64 = scmp.eq.s32.totalorder 0, 0
    // Predicated region
    $region18: #{tpu_custom_call.1} parent=1 // pred_check
      %p65 = pneg %p64
    $region19: #{tpu_custom_call.1} parent=1 // pred_check_branch
      %67 = sbr.rel (%p65) target = $region21
    $region20: #{tpu_custom_call.1} parent=1 // pred_region
      %68 = vst [vmem:[#allocation2] sm:$0xff] 0.0
      %69 = vst [vmem:[#allocation2 + $0x8] sm:$0xff] 0.0
      %70 = vst [vmem:[#allocation2 + $0x10] sm:$0xff] 0.0
      %71 = vst [vmem:[#allocation2 + $0x18] sm:$0xff] 0.0
    $region21: #{tpu_custom_call.1} parent=1 // pred_fallthru
      _
    %v72 = vld [vmem:[#allocation3] sm:$0xff]
    %v73 = vld [vmem:[#allocation3 + $0x8] sm:$0xff]
    %v74 = vld [vmem:[#allocation6] sm:$0xff]
    %v75 = vld [vmem:[#allocation6 + $0x8] sm:$0xff]
    %v76 = vmul.f32 %v72, %v74
    %v77 = vmul.f32 %v73, %v75
    %v78 = vadd.f32 %v72, %v74
    %v79 = vadd.f32 %v73, %v75
    %v80 = vld [vmem:[#allocation2] sm:$0xff]
    %v81 = vld [vmem:[#allocation2 + $0x8] sm:$0xff]
    %v82 = vadd.f32 %v76, 0.0
    %v83 = vadd.f32 %v77, 0.0
    %v84 = vadd.f32 %v80, %v82
    %v85 = vadd.f32 %v81, %v83
    %86 = vst [vmem:[#allocation2] sm:$0xff] %v84
    %87 = vst [vmem:[#allocation2 + $0x8] sm:$0xff] %v85
    %s88 = scalar_lea.vmem [#allocation2], 16
    %v89 = vld [vmem:[%s88] sm:$0xff]
    %v90 = vld [vmem:[%s88 + $0x8] sm:$0xff]
    %v91 = vadd.f32 %v78, 0.0
    %v92 = vadd.f32 %v79, 0.0
    %v93 = vadd.f32 %v89, %v91
    %v94 = vadd.f32 %v90, %v92
    %95 = vst [vmem:[%s88] sm:$0xff] %v93
    %96 = vst [vmem:[%s88 + $0x8] sm:$0xff] %v94
    // Predicated region
    $region22: #{tpu_custom_call.1} parent=1 // pred_check
      %p97 = pneg %p64
    $region23: #{tpu_custom_call.1} parent=1 // pred_check_branch
      %99 = sbr.rel (%p97) target = $region25
    $region24: #{tpu_custom_call.1} parent=1 // pred_region
      %v100 = vld [vmem:[#allocation2] sm:$0xff]
      %v101 = vld [vmem:[#allocation2 + $0x8] sm:$0xff]
      %v102 = vadd.f32 %v100, %v101
      %103 = vadd.xlane.f32.xlu0 %v102
      %v104 = vpop.xlane.xlu0 %103
      %v105 = vrot.slane %v104, 4
      %v106 = vadd.f32 %v104, %v105
      %v107 = vrot.slane %v106, 2
      %v108 = vadd.f32 %v106, %v107
      %v109 = vrot.slane %v108, 1
      %v110 = vadd.f32 %v108, %v109
      %s111 = vtos %v110
      %s112 = scalar_lea.smem [#allocation8], 0
      %113 = sst [smem:[%s112]] %s111
      %v114 = vld [vmem:[%s88] sm:$0xff]
      %v115 = vld [vmem:[%s88 + $0x8] sm:$0xff]
      %v116 = vadd.f32 %v114, %v115
      %117 = vadd.xlane.f32.xlu0 %v116
      %v118 = vpop.xlane.xlu0 %117
      %v119 = vrot.slane %v118, 4
      %v120 = vadd.f32 %v118, %v119
      %v121 = vrot.slane %v120, 2
      %v122 = vadd.f32 %v120, %v121
      %v123 = vrot.slane %v122, 1
      %v124 = vadd.f32 %v122, %v123
      %s125 = vtos %v124
      %s126 = scalar_lea.smem [#allocation8], 1
      %127 = sst [smem:[%s126]] %s125
    $region25: #{tpu_custom_call.1} parent=1 // pred_fallthru
      _
    // Predicated region
    $region26: #{tpu_custom_call.1} parent=1 // pred_check
      _
    $region27: #{tpu_custom_call.1} parent=1 // pred_check_branch
      %129 = sbr.rel (0) target = $region29
    $region28: #{tpu_custom_call.1} parent=1 // pred_region
      %131 = vsyncadd [#allocation5], 0
      %s133 = sshll.u32 %s2, 4
      %s134 = int_to_ptr.hbm [resolvable:$true] %s133
      %136 = dma.smem_to_hbm [#allocation8], 16, %s134, [#allocation5]
    $region29: #{tpu_custom_call.1} parent=1 // pred_fallthru
      _
    // Predicated region
    $region30: #{tpu_custom_call.1} parent=1 // pred_check
      _
    $region31: #{tpu_custom_call.1} parent=1 // pred_check_branch
      %138 = sbr.rel (0) target = $region33
    $region32: #{tpu_custom_call.1} parent=1 // pred_region
      %140 = dma.done [#allocation5], 16
    $region33: #{tpu_custom_call.1} parent=1 // pred_fallthru
      _
    %141 = sfence
    %142 = vsyncpa [#allocation4], 1
    %143 = vsyncpa [#allocation7], 1
    %144 = vsyncpa [#allocation5], 1

</llo_original>
